<compile_context>
chip_gen: v5e
topology: v5e:2x2
jax: 0.10.0
libtpu: 0.0.40
codegen_flags: <defaults>
</compile_context>

<pallas_src>
import functools

import jax
import jax.numpy as jnp
from jax import lax
from jax.experimental import pallas as pl
from jax.experimental.pallas import tpu as pltpu


# ----------------------------------------------------------------------------
# Pallas kernel: two head-fused MXU matmuls + bias + ReLU, lane-dense stores
# ----------------------------------------------------------------------------
def _heads_kernel(patch_ref, wc_ref, b1_ref, w2_ref, b2_ref, o_ref):
    """Fused MoveNet heads for one block of batch elements.

    patch_ref: (Bblk, 9*C, HW)  im2col patches, compute dtype, HW lane-dense
    wc_ref   : (NH*HC, 9*C)     depthwise x first-1x1 folded, head-fused weights
    b1_ref   : (NH*HC, 1)       folded first bias (b1 + dwb @ w1), f32
    w2_ref   : (Kp, NH*HC)      block-diagonal second 1x1 weights (row-packed)
    b2_ref   : (Kp, 1)          packed second bias, f32
    o_ref    : (Bblk, Kp, HW)   f32 output, HW lane-dense
    """
    bblk, _, hw = patch_ref.shape
    cdt = wc_ref.dtype

    # (9*C, Bblk*HW): lane concat at HW-aligned offsets (no-op for Bblk == 1).
    if bblk == 1:
        patch = patch_ref[0]
    else:
        patch = jnp.concatenate([patch_ref[b] for b in range(bblk)], axis=1)

    # Heads-fused depthwise3x3 + first 1x1 + bias + ReLU: ONE MXU dot, K=9*C.
    h1 = jnp.dot(wc_ref[...], patch, preferred_element_type=jnp.float32)
    h1 = jnp.maximum(h1 + b1_ref[...], 0.0)            # (NH*HC, Bblk*HW), f32

    # Heads-fused second 1x1 via block-diagonal weights: ONE MXU dot, K=NH*HC.
    h2 = jnp.dot(w2_ref[...], h1.astype(cdt),
                 preferred_element_type=jnp.float32)
    h2 = h2 + b2_ref[...]                               # (Kp, Bblk*HW), f32

    for b in range(bblk):                               # static, aligned slices
        o_ref[b] = h2[:, b * hw:(b + 1) * hw].astype(o_ref.dtype)


# ----------------------------------------------------------------------------
# Jitted forward wrapper: single pallas_call for all heads and the full batch
# ----------------------------------------------------------------------------
@functools.partial(jax.jit, static_argnames=("head_dims", "batch_block"))
def _movenet_forward(x_nchw, wc_t, b1, w2_bd, b2, *, head_dims, batch_block):
    # TODO(synk): the real MoveNet backbone is an external module; identity here.
    B, C, H, W = x_nchw.shape
    HW = H * W
    cdt = wc_t.dtype
    NHHC, KC9 = wc_t.shape
    Kp = w2_bd.shape[0]
    Bblk = batch_block
    assert B % Bblk == 0
    nblk = B // Bblk

    # Wrapper-side im2col: layout plumbing only (pad + 9 static slices +
    # channel concat), so the kernel sees a lane-dense (9*C, HW) patch and
    # never relays out.  Row order (dy*3+dx)*C + c matches wc_t's columns.
    xp = jnp.pad(x_nchw.astype(jnp.float32), ((0, 0), (0, 0), (1, 1), (1, 1)))
    taps = [xp[:, :, dy:dy + H, dx:dx + W] for dy in range(3) for dx in range(3)]
    patch = jnp.concatenate(taps, axis=1).reshape(B, KC9, HW).astype(cdt)

    out = pl.pallas_call(
        _heads_kernel,
        out_shape=jax.ShapeDtypeStruct((B, Kp, HW), jnp.float32),
        grid_spec=pltpu.PrefetchScalarGridSpec(
            num_scalar_prefetch=0,
            grid=(nblk,),                     # "parallel" -> feeds both v7x TCs
            in_specs=[
                pl.BlockSpec((Bblk, KC9, HW), lambda b: (b, 0, 0)),
                pl.BlockSpec((NHHC, KC9), lambda b: (0, 0)),
                pl.BlockSpec((NHHC, 1), lambda b: (0, 0)),
                pl.BlockSpec((Kp, NHHC), lambda b: (0, 0)),
                pl.BlockSpec((Kp, 1), lambda b: (0, 0)),
            ],
            out_specs=pl.BlockSpec((Bblk, Kp, HW), lambda b: (b, 0, 0)),
        ),
        compiler_params=pltpu.CompilerParams(
            dimension_semantics=("parallel",)),
    )(patch, wc_t, b1, w2_bd, b2)

    # Per-head row slices of the packed output; (B, k, HW) -> (B, k, H, W) is
    # already NCHW, so no transpose is needed.
    ret = {}
    off = 0
    for name, k in head_dims:
        ret[name] = out[:, off:off + k, :].reshape(B, k, H, W)
        off += k
    return ret


# ----------------------------------------------------------------------------
# MoveNet (backbone == identity; all heads through one fused Pallas kernel)
# ----------------------------------------------------------------------------
class MoveNetPallas:
    OUT_CHANNELS = 24

    def __init__(self, heads, head_conv, key, compute_dtype=jnp.bfloat16):
        # TODO(synk): the torch `head_conv <= 0` single-conv branch is not implemented.
        assert head_conv > 0
        self.heads = dict(heads)
        self.head_conv = head_conv
        self.compute_dtype = compute_dtype
        C, HC = self.OUT_CHANNELS, head_conv
        NH = len(self.heads)

        # Raw per-head parameters (f32, matching the torch layer semantics).
        self.params = {}
        for head, classes in self.heads.items():
            key, k1, k2, k3, k4, k5, k6 = jax.random.split(key, 7)
            dww = 0.1 * jax.random.normal(k1, (3, 3, C), jnp.float32)
            dwb = 0.1 * jax.random.normal(k2, (C,), jnp.float32)
            w1 = 0.1 * jax.random.normal(k3, (C, HC), jnp.float32)
            b1 = 0.1 * jax.random.normal(k4, (HC,), jnp.float32)
            w2 = 0.1 * jax.random.normal(k5, (HC, classes), jnp.float32)
            b2 = 0.1 * jax.random.normal(k6, (classes,), jnp.float32)
            self.params[head] = (dww, dwb, w1, b1, w2, b2)

        # One-time weight preprocessing for the fused kernel:
        #  - fold the depthwise 3x3 into the first 1x1 (im2col weight, K=9*C),
        #  - fuse all heads along the first-1x1 output dim (NH*HC columns),
        #  - build a block-diagonal, row-packed second 1x1 (Kp x NH*HC).
        K_total = sum(self.heads.values())
        Kp = max(8, ((K_total + 7) // 8) * 8)
        wc_blocks, b1_blocks = [], []
        w2_bd = jnp.zeros((Kp, NH * HC), jnp.float32)
        b2_p = jnp.zeros((Kp, 1), jnp.float32)
        off = 0
        for h, (head, classes) in enumerate(self.heads.items()):
            dww, dwb, w1, b1, w2, b2 = self.params[head]
            # Wc[(dy*3+dx)*C + c, hc] = dww[dy, dx, c] * w1[c, hc]
            wc = (dww.reshape(9, C, 1) * w1.reshape(1, C, HC)).reshape(9 * C, HC)
            wc_blocks.append(wc)
            b1_blocks.append(b1 + jnp.dot(dwb, w1, precision=lax.Precision.HIGHEST))
            w2_bd = w2_bd.at[off:off + classes, h * HC:(h + 1) * HC].set(w2.T)
            b2_p = b2_p.at[off:off + classes, 0].set(b2)
            off += classes
        self.wc_t = jnp.concatenate(wc_blocks, axis=1).T.astype(compute_dtype)
        self.b1 = jnp.concatenate(b1_blocks).reshape(NH * HC, 1).astype(jnp.float32)
        self.w2_bd = w2_bd.astype(compute_dtype)
        self.b2 = b2_p
        self.head_dims = tuple(self.heads.items())

    @staticmethod
    def _pick_batch_block(batch):
        # Keep >= 2 "parallel" grid steps (v7x has 2 TensorCores sharing the
        # grid), while larger batches use fatter blocks to amortize per-step
        # overhead and widen the MXU N dimension.
        if batch <= 2:
            return 1
        for blk in (8, 4, 2):
            if batch % blk == 0 and batch // blk >= 2:
                return blk
        return 1

    def __call__(self, x_nchw):
        ret = _movenet_forward(
            x_nchw, self.wc_t, self.b1, self.w2_bd, self.b2,
            head_dims=self.head_dims,
            batch_block=self._pick_batch_block(x_nchw.shape[0]))
        return [ret]


# ----------------------------------------------------------------------------
# Pure-JAX reference for correctness checking
# ----------------------------------------------------------------------------
def _ref_head(x_nhwc, params):
    dww, dwb, w1, b1, w2, b2 = params
    C = dww.shape[2]
    rhs = dww.reshape(3, 3, 1, C)                      # HWIO, I = 1 (grouped)
    y = lax.conv_general_dilated(
        x_nhwc, rhs, window_strides=(1, 1), padding="SAME",
        dimension_numbers=("NHWC", "HWIO", "NHWC"),
        feature_group_count=C, precision=lax.Precision.HIGHEST)
    y = y + dwb.reshape(1, 1, 1, C)
    y = jnp.einsum("bhwc,cd->bhwd", y, w1,
                   precision=lax.Precision.HIGHEST) + b1.reshape(1, 1, 1, -1)
    y = jnp.maximum(y, 0.0)
    y = jnp.einsum("bhwd,dk->bhwk", y, w2,
                   precision=lax.Precision.HIGHEST) + b2.reshape(1, 1, 1, -1)
    return y


if __name__ == "__main__":
    key = jax.random.PRNGKey(0)
    key, kx, kx4, kp = jax.random.split(key, 4)

    # Small shapes consistent with the module (out_channels = 24 is fixed by
    # MoveNet; the backbone is identity so the input carries those channels).
    B, C, H, W = 2, 24, 16, 16
    heads = {"hm": 1, "hm_hp": 17, "hps": 34, "hp_offset": 34}
    head_conv = 32

    x = jax.random.normal(kx, (B, C, H, W), jnp.float32)   # NCHW features

    # f32 compute path (tighter check) and default bf16 MXU path (same params).
    model_f32 = MoveNetPallas(heads, head_conv, kp, compute_dtype=jnp.float32)
    model_bf16 = MoveNetPallas(heads, head_conv, kp, compute_dtype=jnp.bfloat16)
    out_f32 = model_f32(x)[0]
    out_bf16 = model_bf16(x)[0]
    jax.block_until_ready((out_f32, out_bf16))

    x_nhwc = jnp.transpose(x, (0, 2, 3, 1))
    for head in heads:
        want = jnp.transpose(_ref_head(x_nhwc, model_f32.params[head]),
                             (0, 3, 1, 2))                      # NCHW
        got32, got16 = out_f32[head], out_bf16[head]
        assert got32.shape == want.shape, (head, got32.shape, want.shape)
        err32 = float(jnp.max(jnp.abs(got32 - want)))
        err16 = float(jnp.max(jnp.abs(got16 - want)))
        # Tolerances sized per review: cover MXU default-precision f32 matmuls
        # and the bf16 input/weight cast (errors measured well below these).
        assert err32 < 2e-2, (head, err32)
        assert err16 < 6e-2, (head, err16)

    # Also exercise the batch-blocked path (B=4 -> Bblk=2, still 2 parallel
    # grid steps so v7x keeps both TensorCores busy).
    x4 = jax.random.normal(kx4, (4, C, H, W), jnp.float32)
    out4 = model_bf16(x4)[0]
    jax.block_until_ready(out4)
    x4_nhwc = jnp.transpose(x4, (0, 2, 3, 1))
    for head in heads:
        want4 = jnp.transpose(_ref_head(x4_nhwc, model_bf16.params[head]),
                              (0, 3, 1, 2))
        err4 = float(jnp.max(jnp.abs(out4[head] - want4)))
        assert err4 < 6e-2, (head, err4)

    print("KERNEL_OK")
</pallas_src>

<mosaic_0001>
module attributes {stable_mosaic.version = 11 : i64} {
  func.func @_heads_kernel(%arg0: i32, %arg1: memref<1x216x256xf32, #tpu.memory_space<vmem>>, %arg2: memref<128x216xf32, #tpu.memory_space<vmem>>, %arg3: memref<128x1xf32, #tpu.memory_space<vmem>>, %arg4: memref<88x128xf32, #tpu.memory_space<vmem>>, %arg5: memref<88x1xf32, #tpu.memory_space<vmem>>, %arg6: memref<1x88x256xf32, #tpu.memory_space<vmem>>) attributes {dimension_semantics = [#tpu.dimension_semantics<parallel>], iteration_bounds = array<i64: 2>, scalar_prefetch = 0 : i64, scratch_operands = 0 : i64, tpu.core_type = #tpu.core_type<tc>, window_params = [{transform_indices = @transform_0, window_bounds = array<i64: 1, 216, 256>}, {pipeline_mode = #tpu.pipeline_mode<synchronous>, transform_indices = @transform_1, window_bounds = array<i64: 128, 216>}, {pipeline_mode = #tpu.pipeline_mode<synchronous>, transform_indices = @transform_2, window_bounds = array<i64: 128, 1>}, {pipeline_mode = #tpu.pipeline_mode<synchronous>, transform_indices = @transform_3, window_bounds = array<i64: 88, 128>}, {pipeline_mode = #tpu.pipeline_mode<synchronous>, transform_indices = @transform_4, window_bounds = array<i64: 88, 1>}, {transform_indices = @transform_5, window_bounds = array<i64: 1, 88, 256>}]} {
    %c0 = arith.constant 0 : index
    %c0_0 = arith.constant 0 : index
    %c0_1 = arith.constant 0 : index
    %0 = vector.load %arg1[%c0, %c0_0, %c0_1] : memref<1x216x256xf32, #tpu.memory_space<vmem>>, vector<1x216x256xf32>
    %1 = vector.shape_cast %0 : vector<1x216x256xf32> to vector<216x256xf32>
    %c0_2 = arith.constant 0 : index
    %c0_3 = arith.constant 0 : index
    %2 = vector.load %arg2[%c0_2, %c0_3] : memref<128x216xf32, #tpu.memory_space<vmem>>, vector<128x216xf32>
    %cst = arith.constant dense<0.000000e+00> : vector<128x256xf32>
    %3 = tpu.matmul %2, %1, %cst {dimension_numbers = #tpu.dot_dimension_numbers<[1], [0], [0], [1], [0, 0, 1, 1], [], []>} : vector<128x216xf32>, vector<216x256xf32>, vector<128x256xf32> -> vector<128x256xf32>
    %c0_4 = arith.constant 0 : index
    %c0_5 = arith.constant 0 : index
    %4 = vector.load %arg3[%c0_4, %c0_5] : memref<128x1xf32, #tpu.memory_space<vmem>>, vector<128x1xf32>
    %5 = vector.broadcast %4 : vector<128x1xf32> to vector<128x256xf32>
    %6 = arith.addf %3, %5 : vector<128x256xf32>
    %cst_6 = arith.constant 0.000000e+00 : f32
    %7 = vector.broadcast %cst_6 : f32 to vector<128x256xf32>
    %8 = arith.maximumf %6, %7 : vector<128x256xf32>
    %c0_7 = arith.constant 0 : index
    %c0_8 = arith.constant 0 : index
    %9 = vector.load %arg4[%c0_7, %c0_8] : memref<88x128xf32, #tpu.memory_space<vmem>>, vector<88x128xf32>
    %cst_9 = arith.constant dense<0.000000e+00> : vector<88x256xf32>
    %10 = tpu.matmul %9, %8, %cst_9 {dimension_numbers = #tpu.dot_dimension_numbers<[1], [0], [0], [1], [0, 0, 1, 1], [], []>} : vector<88x128xf32>, vector<128x256xf32>, vector<88x256xf32> -> vector<88x256xf32>
    %c0_10 = arith.constant 0 : index
    %c0_11 = arith.constant 0 : index
    %11 = vector.load %arg5[%c0_10, %c0_11] : memref<88x1xf32, #tpu.memory_space<vmem>>, vector<88x1xf32>
    %12 = vector.broadcast %11 : vector<88x1xf32> to vector<88x256xf32>
    %13 = arith.addf %10, %12 : vector<88x256xf32>
    %c0_12 = arith.constant 0 : index
    %c0_13 = arith.constant 0 : index
    %c0_14 = arith.constant 0 : index
    %14 = vector.load %arg6[%c0_12, %c0_13, %c0_14] : memref<1x88x256xf32, #tpu.memory_space<vmem>>, vector<1x88x256xf32>
    %15 = vector.shape_cast %14 : vector<1x88x256xf32> to vector<88x256xf32>
    %16 = vector.shape_cast %13 : vector<88x256xf32> to vector<1x88x256xf32>
    tpu.vector_store %arg6[%c0_12, %c0_13, %c0_14], %16 {strides = array<i32>} : memref<1x88x256xf32, #tpu.memory_space<vmem>>, vector<1x88x256xf32>,
    return
  }
  func.func @transform_0(%arg0: i32) -> (i32, i32, i32) {
    %c0_i32 = arith.constant 0 : i32
    %c0_i32_0 = arith.constant 0 : i32
    %c0_i32_1 = arith.constant 0 : i32
    return %arg0, %c0_i32, %c0_i32_0 : i32, i32, i32
  }
  func.func @transform_1(%arg0: i32) -> (i32, i32) {
    %c0_i32 = arith.constant 0 : i32
    %c0_i32_0 = arith.constant 0 : i32
    %c0_i32_1 = arith.constant 0 : i32
    return %c0_i32, %c0_i32_0 : i32, i32
  }
  func.func @transform_2(%arg0: i32) -> (i32, i32) {
    %c0_i32 = arith.constant 0 : i32
    %c0_i32_0 = arith.constant 0 : i32
    %c0_i32_1 = arith.constant 0 : i32
    return %c0_i32, %c0_i32_0 : i32, i32
  }
  func.func @transform_3(%arg0: i32) -> (i32, i32) {
    %c0_i32 = arith.constant 0 : i32
    %c0_i32_0 = arith.constant 0 : i32
    %c0_i32_1 = arith.constant 0 : i32
    return %c0_i32, %c0_i32_0 : i32, i32
  }
  func.func @transform_4(%arg0: i32) -> (i32, i32) {
    %c0_i32 = arith.constant 0 : i32
    %c0_i32_0 = arith.constant 0 : i32
    %c0_i32_1 = arith.constant 0 : i32
    return %c0_i32, %c0_i32_0 : i32, i32
  }
  func.func @transform_5(%arg0: i32) -> (i32, i32, i32) {
    %c0_i32 = arith.constant 0 : i32
    %c0_i32_0 = arith.constant 0 : i32
    %c0_i32_1 = arith.constant 0 : i32
    return %arg0, %c0_i32, %c0_i32_0 : i32, i32, i32
  }
}

</mosaic_0001>

<llo_original>
// kernel: _movenet_forward.1
$region0: #{_movenet_forward.1}
  #allocation0 [shape = 'u32[]', space=smem, size = 0x4, offset = 0x4, fixed_abs, tag = 'smem constant byte address 0x4 - core index']
  #allocation1 [shape = 'u32[72,128]{1,0:T(1,128)}', space=vmem, size = 0x9000, scoped, tag = 'internal scratch']
  %s0 = inlined_call_operand.vmem [shape: f32[2,216,256], index: 0, kind: input, shape index: {}]
  %s1 = inlined_call_operand.vmem [shape: f32[128,216], index: 1, kind: input, shape index: {}]
  %s2 = inlined_call_operand.vmem [shape: f32[128,1], index: 2, kind: input, shape index: {}]
  %s3 = inlined_call_operand.vmem [shape: f32[88,128], index: 3, kind: input, shape index: {}]
  %s4 = inlined_call_operand.vmem [shape: f32[88,1], index: 4, kind: input, shape index: {}]
  %s5 = inlined_call_operand.vmem [shape: f32[2,88,256], index: 5, kind: output, shape index: {}]
  %s6 = sld [smem:[#allocation0]]
  $region53: #{_movenet_forward.1} parent=0
    _
  %s8 = ssub.s32 1, %s6
  %s9 = scalar_select 0, %s8, %s6
  loop: start=0, step=1, limit=4
  $region2: #{_movenet_forward.1} parent=0 // loop_pre_header
    _
  $region3: #{_movenet_forward.1} parent=0 // loop_header
    %s11 = sphi 0, %s15
    %p12 = scmp.ge.s32.totalorder %s11, 4
    %s21 = sphi 0, %s23
    %s24 = sphi 0, %s21
    %s25 = sphi 0, %s24
    %s41 = sphi 0, %s25
    %s45 = sphi 0, %s45
    %s47 = sphi 0, %s45
    %s48 = sphi 0, %s47
    %s62 = sphi 0, %s48
    %s66 = sphi 0, %s66
    %s68 = sphi 0, %s66
    %s69 = sphi 0, %s68
    %s83 = sphi 0, %s69
    %s87 = sphi 0, %s87
    %s89 = sphi 0, %s87
    %s90 = sphi 0, %s89
    %s104 = sphi 0, %s90
    %s108 = sphi 0, %s108
    %s110 = sphi 0, %s108
    %s111 = sphi 0, %s110
    %s125 = sphi 0, %s111
    %s131 = sphi 0, %s133
    %s134 = sphi 0, %s131
    %s135 = sphi 0, %s134
    %s151 = sphi 0, %s135
  $region4: #{_movenet_forward.1} parent=0 // loop_header_branch
    %14 = sbr.rel (%p12) target = $region8
  $region5: #{_movenet_forward.1} parent=0 // loop_body
    %s16 = ssub.s32 %s11, 1
    %s17 = ssub.s32 %s11, 2
    %s18 = sadd.s32 %s11, 1
    %s19 = ssub.s32 %s11, %s18
    %p20 = scmp.eq.s32.totalorder %s19, 0
    %s22 = sadd.s32 %s21, 1
    %s23 = scalar_select %p20, %s21, %s22
    %p26 = pneg %p20
    %p27 = scmp.eq.s32.totalorder %s11, 1
    %p28 = por %p26, %p27
    %p29 = scmp.ne.s32.totalorder %s21, %s24
    %p30 = scmp.eq.s32.totalorder %s11, 0
    %p31 = por %p29, %p30
    %p32 = scmp.ne.s32.totalorder %s21, %s24
    %p33 = scmp.eq.s32.totalorder %s16, 1
    %p34 = por %p32, %p33
    %p35 = scmp.ne.s32.totalorder %s24, %s25
    %p36 = scmp.eq.s32.totalorder %s16, 0
    %p37 = por %p35, %p36
    %p38 = scmp.ne.s32.totalorder %s24, %s25
    %p39 = scmp.eq.s32.totalorder %s17, 1
    %p40 = por %p38, %p39
    %p42 = scmp.ne.s32.totalorder %s25, %s41
    %p43 = scmp.eq.s32.totalorder %s17, 0
    %p44 = por %p42, %p43
    %s46 = sadd.s32 %s45, 1
    %p49 = scmp.eq.s32.totalorder %s11, 1
    %p50 = scmp.ne.s32.totalorder %s45, %s47
    %p51 = scmp.eq.s32.totalorder %s11, 0
    %p52 = por %p50, %p51
    %p53 = scmp.ne.s32.totalorder %s45, %s47
    %p54 = scmp.eq.s32.totalorder %s16, 1
    %p55 = por %p53, %p54
    %p56 = scmp.ne.s32.totalorder %s47, %s48
    %p57 = scmp.eq.s32.totalorder %s16, 0
    %p58 = por %p56, %p57
    %p59 = scmp.ne.s32.totalorder %s47, %s48
    %p60 = scmp.eq.s32.totalorder %s17, 1
    %p61 = por %p59, %p60
    %p63 = scmp.ne.s32.totalorder %s48, %s62
    %p64 = scmp.eq.s32.totalorder %s17, 0
    %p65 = por %p63, %p64
    %s67 = sadd.s32 %s66, 1
    %p70 = scmp.eq.s32.totalorder %s11, 1
    %p71 = scmp.ne.s32.totalorder %s66, %s68
    %p72 = scmp.eq.s32.totalorder %s11, 0
    %p73 = por %p71, %p72
    %p74 = scmp.ne.s32.totalorder %s66, %s68
    %p75 = scmp.eq.s32.totalorder %s16, 1
    %p76 = por %p74, %p75
    %p77 = scmp.ne.s32.totalorder %s68, %s69
    %p78 = scmp.eq.s32.totalorder %s16, 0
    %p79 = por %p77, %p78
    %p80 = scmp.ne.s32.totalorder %s68, %s69
    %p81 = scmp.eq.s32.totalorder %s17, 1
    %p82 = por %p80, %p81
    %p84 = scmp.ne.s32.totalorder %s69, %s83
    %p85 = scmp.eq.s32.totalorder %s17, 0
    %p86 = por %p84, %p85
    %s88 = sadd.s32 %s87, 1
    %p91 = scmp.eq.s32.totalorder %s11, 1
    %p92 = scmp.ne.s32.totalorder %s87, %s89
    %p93 = scmp.eq.s32.totalorder %s11, 0
    %p94 = por %p92, %p93
    %p95 = scmp.ne.s32.totalorder %s87, %s89
    %p96 = scmp.eq.s32.totalorder %s16, 1
    %p97 = por %p95, %p96
    %p98 = scmp.ne.s32.totalorder %s89, %s90
    %p99 = scmp.eq.s32.totalorder %s16, 0
    %p100 = por %p98, %p99
    %p101 = scmp.ne.s32.totalorder %s89, %s90
    %p102 = scmp.eq.s32.totalorder %s17, 1
    %p103 = por %p101, %p102
    %p105 = scmp.ne.s32.totalorder %s90, %s104
    %p106 = scmp.eq.s32.totalorder %s17, 0
    %p107 = por %p105, %p106
    %s109 = sadd.s32 %s108, 1
    %p112 = scmp.eq.s32.totalorder %s11, 1
    %p113 = scmp.ne.s32.totalorder %s108, %s110
    %p114 = scmp.eq.s32.totalorder %s11, 0
    %p115 = por %p113, %p114
    %p116 = scmp.ne.s32.totalorder %s108, %s110
    %p117 = scmp.eq.s32.totalorder %s16, 1
    %p118 = por %p116, %p117
    %p119 = scmp.ne.s32.totalorder %s110, %s111
    %p120 = scmp.eq.s32.totalorder %s16, 0
    %p121 = por %p119, %p120
    %p122 = scmp.ne.s32.totalorder %s110, %s111
    %p123 = scmp.eq.s32.totalorder %s17, 1
    %p124 = por %p122, %p123
    %p126 = scmp.ne.s32.totalorder %s111, %s125
    %p127 = scmp.eq.s32.totalorder %s17, 0
    %p128 = por %p126, %p127
    %s129 = ssub.s32 %s11, %s18
    %p130 = scmp.eq.s32.totalorder %s129, 0
    %s132 = sadd.s32 %s131, 1
    %s133 = scalar_select %p130, %s131, %s132
    %p136 = pneg %p130
    %p137 = scmp.eq.s32.totalorder %s11, 1
    %p138 = por %p136, %p137
    %p139 = scmp.ne.s32.totalorder %s131, %s134
    %p140 = scmp.eq.s32.totalorder %s11, 0
    %p141 = por %p139, %p140
    %p142 = scmp.ne.s32.totalorder %s131, %s134
    %p143 = scmp.eq.s32.totalorder %s16, 1
    %p144 = por %p142, %p143
    %p145 = scmp.ne.s32.totalorder %s134, %s135
    %p146 = scmp.eq.s32.totalorder %s16, 0
    %p147 = por %p145, %p146
    %p148 = scmp.ne.s32.totalorder %s134, %s135
    %p149 = scmp.eq.s32.totalorder %s17, 1
    %p150 = por %p148, %p149
    %p152 = scmp.ne.s32.totalorder %s135, %s151
    %p153 = scmp.eq.s32.totalorder %s17, 0
    %p154 = por %p152, %p153
    %p155 = scmp.le.s32.totalorder 1, %s11
    %p156 = scmp.lt.s32.totalorder %s11, 3
    %p157 = pnand %p155, %p156
    %p158 = pneg %p157
    // Predicated region
    $region9: #{_movenet_forward.1} parent=5 // pred_check
      _
    $region10: #{_movenet_forward.1} parent=5 // pred_check_branch
      %160 = sbr.rel (%p157) target = $region12
    $region11: #{_movenet_forward.1} parent=5 // pred_region
      %s161 = ssub.s32 %s11, 1
      // Predicated region
      $region13: #{_movenet_forward.1} parent=11 // pred_check
        %p162 = pneg %p58
      $region14: #{_movenet_forward.1} parent=11 // pred_check_branch
        %164 = sbr.rel (%p162) target = $region16
      $region15: #{_movenet_forward.1} parent=11 // pred_region
        _
      $region16: #{_movenet_forward.1} parent=11 // pred_fallthru
        _
      // Predicated region
      $region17: #{_movenet_forward.1} parent=11 // pred_check
        %p165 = pneg %p79
      $region18: #{_movenet_forward.1} parent=11 // pred_check_branch
        %167 = sbr.rel (%p165) target = $region20
      $region19: #{_movenet_forward.1} parent=11 // pred_region
        _
      $region20: #{_movenet_forward.1} parent=11 // pred_fallthru
        _
      // Predicated region
      $region21: #{_movenet_forward.1} parent=11 // pred_check
        %p168 = pneg %p100
      $region22: #{_movenet_forward.1} parent=11 // pred_check_branch
        %170 = sbr.rel (%p168) target = $region24
      $region23: #{_movenet_forward.1} parent=11 // pred_region
        _
      $region24: #{_movenet_forward.1} parent=11 // pred_fallthru
        _
      // Predicated region
      $region25: #{_movenet_forward.1} parent=11 // pred_check
        %p171 = pneg %p121
      $region26: #{_movenet_forward.1} parent=11 // pred_check_branch
        %173 = sbr.rel (%p171) target = $region28
      $region27: #{_movenet_forward.1} parent=11 // pred_region
        _
      $region28: #{_movenet_forward.1} parent=11 // pred_fallthru
        _
    $region12: #{_movenet_forward.1} parent=5 // pred_fallthru
      _
    %p174 = scmp.lt.s32.totalorder %s11, 2
    // Predicated region
    $region29: #{_movenet_forward.1} parent=5 // pred_check
      %p175 = pneg %p174
    $region30: #{_movenet_forward.1} parent=5 // pred_check_branch
      %177 = sbr.rel (%p175) target = $region32
    $region31: #{_movenet_forward.1} parent=5 // pred_region
      // Predicated region
      $region33: #{_movenet_forward.1} parent=31 // pred_check
        %p178 = pneg %p31
      $region34: #{_movenet_forward.1} parent=31 // pred_check_branch
        %180 = sbr.rel (%p178) target = $region36
      $region35: #{_movenet_forward.1} parent=31 // pred_region
        %p181 = scmp.lt.s32.totalorder %s11, 1
        %s182 = scalar_select %p181, %s11, 1
        %s183 = smul.addr %s182, 54
        %s184 = smul.addr %s183, 8
        %s185 = scalar_lea.vmem %s0, %s184
      $region36: #{_movenet_forward.1} parent=31 // pred_fallthru
        _
    $region32: #{_movenet_forward.1} parent=5 // pred_fallthru
      _
    %p186 = scmp.le.s32.totalorder 1, %s11
    %p187 = scmp.lt.s32.totalorder %s11, 3
    %p188 = pnand %p186, %p187
    %p189 = pneg %p188
    // Predicated region
    $region37: #{_movenet_forward.1} parent=5 // pred_check
      _
    $region38: #{_movenet_forward.1} parent=5 // pred_check_branch
      %191 = sbr.rel (%p188) target = $region40
    $region39: #{_movenet_forward.1} parent=5 // pred_region
      %s192 = ssub.s32 %s11, 1
      %p193 = scmp.lt.s32.totalorder %s16, 1
      %s194 = scalar_select %p193, %s16, 1
      %s195 = smul.addr %s194, 54
      %s196 = smul.addr %s195, 8
      %s197 = scalar_lea.vmem %s0, %s196
      %p198 = pneg %p37
      %p199 = pneg %p34
      %p200 = pneg %p58
      %p201 = pneg %p55
      %p202 = pneg %p79
      %p203 = pneg %p76
      %p204 = pneg %p100
      %p205 = pneg %p97
      %p206 = pneg %p121
      %p207 = pneg %p118
      %p208 = pneg %p147
      %p209 = pneg %p144
      %p210 = scmp.lt.s32.totalorder %s16, 1
      %s211 = scalar_select %p210, %s16, 1
      %s212 = smul.addr %s211, 22
      %s213 = smul.addr %s212, 8
      %s214 = scalar_lea.vmem %s5, %s213
      %p215 = scmp.lt.s32.totalorder %s16, 1
      %s216 = scalar_select %p215, %s16, 1
      %s217 = smul.addr %s216, 54
      %s218 = smul.addr %s217, 8
      %s219 = scalar_lea.vmem %s0, %s218
      %p220 = scmp.lt.s32.totalorder %s16, 1
      %s221 = scalar_select %p220, %s16, 1
      %s222 = smul.addr %s221, 22
      %s223 = smul.addr %s222, 8
      %s224 = scalar_lea.vmem %s5, %s223
      %v225 = vld [vmem:[%s219] sm:$0xff]
      %v226 = vld [vmem:[%s219 + $0x8] sm:$0xff]
      %v227 = vld [vmem:[%s219 + $0x10] sm:$0xff]
      %v228 = vld [vmem:[%s219 + $0x18] sm:$0xff]
      %v229 = vld [vmem:[%s219 + $0x20] sm:$0xff]
      %v230 = vld [vmem:[%s219 + $0x28] sm:$0xff]
      %v231 = vld [vmem:[%s219 + $0x30] sm:$0xff]
      %v232 = vld [vmem:[%s219 + $0x38] sm:$0xff]
      %v233 = vld [vmem:[%s219 + $0x40] sm:$0xff]
      %v234 = vld [vmem:[%s219 + $0x48] sm:$0xff]
      %v235 = vld [vmem:[%s219 + $0x50] sm:$0xff]
      %v236 = vld [vmem:[%s219 + $0x58] sm:$0xff]
      %v237 = vld [vmem:[%s219 + $0x60] sm:$0xff]
      %v238 = vld [vmem:[%s219 + $0x68] sm:$0xff]
      %v239 = vld [vmem:[%s219 + $0x70] sm:$0xff]
      %v240 = vld [vmem:[%s219 + $0x78] sm:$0xff]
      %v241 = vld [vmem:[%s219 + $0x80] sm:$0xff]
      %v242 = vld [vmem:[%s219 + $0x88] sm:$0xff]
      %v243 = vld [vmem:[%s219 + $0x90] sm:$0xff]
      %v244 = vld [vmem:[%s219 + $0x98] sm:$0xff]
      %v245 = vld [vmem:[%s219 + $0xa0] sm:$0xff]
      %v246 = vld [vmem:[%s219 + $0xa8] sm:$0xff]
      %v247 = vld [vmem:[%s219 + $0xb0] sm:$0xff]
      %v248 = vld [vmem:[%s219 + $0xb8] sm:$0xff]
      %v249 = vld [vmem:[%s219 + $0xc0] sm:$0xff]
      %v250 = vld [vmem:[%s219 + $0xc8] sm:$0xff]
      %v251 = vld [vmem:[%s219 + $0xd0] sm:$0xff]
      %v252 = vld [vmem:[%s219 + $0xd8] sm:$0xff]
      %v253 = vld [vmem:[%s219 + $0xe0] sm:$0xff]
      %v254 = vld [vmem:[%s219 + $0xe8] sm:$0xff]
      %v255 = vld [vmem:[%s219 + $0xf0] sm:$0xff]
      %v256 = vld [vmem:[%s219 + $0xf8] sm:$0xff]
      %v257 = vld [vmem:[%s219 + $0x100] sm:$0xff]
      %v258 = vld [vmem:[%s219 + $0x108] sm:$0xff]
      %v259 = vld [vmem:[%s219 + $0x110] sm:$0xff]
      %v260 = vld [vmem:[%s219 + $0x118] sm:$0xff]
      %v261 = vld [vmem:[%s219 + $0x120] sm:$0xff]
      %v262 = vld [vmem:[%s219 + $0x128] sm:$0xff]
      %v263 = vld [vmem:[%s219 + $0x130] sm:$0xff]
      %v264 = vld [vmem:[%s219 + $0x138] sm:$0xff]
      %v265 = vld [vmem:[%s219 + $0x140] sm:$0xff]
      %v266 = vld [vmem:[%s219 + $0x148] sm:$0xff]
      %v267 = vld [vmem:[%s219 + $0x150] sm:$0xff]
      %v268 = vld [vmem:[%s219 + $0x158] sm:$0xff]
      %v269 = vld [vmem:[%s219 + $0x160] sm:$0xff]
      %v270 = vld [vmem:[%s219 + $0x168] sm:$0xff]
      %v271 = vld [vmem:[%s219 + $0x170] sm:$0xff]
      %v272 = vld [vmem:[%s219 + $0x178] sm:$0xff]
      %v273 = vld [vmem:[%s219 + $0x180] sm:$0xff]
      %v274 = vld [vmem:[%s219 + $0x188] sm:$0xff]
      %v275 = vld [vmem:[%s219 + $0x190] sm:$0xff]
      %v276 = vld [vmem:[%s219 + $0x198] sm:$0xff]
      %v277 = vld [vmem:[%s219 + $0x1a0] sm:$0xff]
      %v278 = vld [vmem:[%s219 + $0x1a8] sm:$0xff]
      %v279 = vld [vmem:[%s1] sm:$0xff]
      %v280 = vld [vmem:[%s1 + $0x8] sm:$0xff]
      %v281 = vld [vmem:[%s1 + $0x10] sm:$0xff]
      %v282 = vld [vmem:[%s1 + $0x18] sm:$0xff]
      %v283 = vld [vmem:[%s1 + $0x20] sm:$0xff]
      %v284 = vld [vmem:[%s1 + $0x28] sm:$0xff]
      %v285 = vld [vmem:[%s1 + $0x30] sm:$0xff]
      %v286 = vld [vmem:[%s1 + $0x38] sm:$0xff]
      %v287 = vld [vmem:[%s1 + $0x40] sm:$0xff]
      %v288 = vld [vmem:[%s1 + $0x48] sm:$0xff]
      %v289 = vld [vmem:[%s1 + $0x50] sm:$0xff]
      %v290 = vld [vmem:[%s1 + $0x58] sm:$0xff]
      %v291 = vld [vmem:[%s1 + $0x60] sm:$0xff]
      %v292 = vld [vmem:[%s1 + $0x68] sm:$0xff]
      %v293 = vld [vmem:[%s1 + $0x70] sm:$0xff]
      %v294 = vld [vmem:[%s1 + $0x78] sm:$0xff]
      %v295 = vld [vmem:[%s1 + $0x80] sm:$0xff]
      %v296 = vld [vmem:[%s1 + $0x88] sm:$0xff]
      %v297 = vld [vmem:[%s1 + $0x90] sm:$0xff]
      %v298 = vld [vmem:[%s1 + $0x98] sm:$0xff]
      %v299 = vld [vmem:[%s1 + $0xa0] sm:$0xff]
      %v300 = vld [vmem:[%s1 + $0xa8] sm:$0xff]
      %v301 = vld [vmem:[%s1 + $0xb0] sm:$0xff]
      %v302 = vld [vmem:[%s1 + $0xb8] sm:$0xff]
      %v303 = vld [vmem:[%s1 + $0xc0] sm:$0xff]
      %v304 = vld [vmem:[%s1 + $0xc8] sm:$0xff]
      %v305 = vld [vmem:[%s1 + $0xd0] sm:$0xff]
      %v306 = vld [vmem:[%s1 + $0xd8] sm:$0xff]
      %v307 = vld [vmem:[%s1 + $0xe0] sm:$0xff]
      %v308 = vld [vmem:[%s1 + $0xe8] sm:$0xff]
      %v309 = vld [vmem:[%s1 + $0xf0] sm:$0xff]
      %v310 = vld [vmem:[%s1 + $0xf8] sm:$0xff]
      %v311 = vld [vmem:[%s2] sm:$0xff]
      %v312 = vld [vmem:[%s2 + $0x8] sm:$0xff]
      %v313 = vld [vmem:[%s2 + $0x10] sm:$0xff]
      %v314 = vld [vmem:[%s2 + $0x18] sm:$0xff]
      %v315 = vld [vmem:[%s2 + $0x20] sm:$0xff]
      %v316 = vld [vmem:[%s2 + $0x28] sm:$0xff]
      %v317 = vld [vmem:[%s2 + $0x30] sm:$0xff]
      %v318 = vld [vmem:[%s2 + $0x38] sm:$0xff]
      %v319 = vld [vmem:[%s2 + $0x40] sm:$0xff]
      %v320 = vld [vmem:[%s2 + $0x48] sm:$0xff]
      %v321 = vld [vmem:[%s2 + $0x50] sm:$0xff]
      %v322 = vld [vmem:[%s2 + $0x58] sm:$0xff]
      %v323 = vld [vmem:[%s2 + $0x60] sm:$0xff]
      %v324 = vld [vmem:[%s2 + $0x68] sm:$0xff]
      %v325 = vld [vmem:[%s2 + $0x70] sm:$0xff]
      %v326 = vld [vmem:[%s2 + $0x78] sm:$0xff]
      %328 = vset.pattern.permute.xlu0 0
      %329 = vperm.xlu0 %328, %v311
      %v330 = vpop.permute.xlu0 %329
      %333 = vset.pattern.permute.xlu0 0
      %334 = vperm.xlu0 %333, %v312
      %v335 = vpop.permute.xlu0 %334
      %338 = vset.pattern.permute.xlu0 0
      %339 = vperm.xlu0 %338, %v313
      %v340 = vpop.permute.xlu0 %339
      %343 = vset.pattern.permute.xlu0 0
      %344 = vperm.xlu0 %343, %v314
      %v345 = vpop.permute.xlu0 %344
      %348 = vset.pattern.permute.xlu0 0
      %349 = vperm.xlu0 %348, %v315
      %v350 = vpop.permute.xlu0 %349
      %353 = vset.pattern.permute.xlu0 0
      %354 = vperm.xlu0 %353, %v316
      %v355 = vpop.permute.xlu0 %354
      %358 = vset.pattern.permute.xlu0 0
      %359 = vperm.xlu0 %358, %v317
      %v360 = vpop.permute.xlu0 %359
      %363 = vset.pattern.permute.xlu0 0
      %364 = vperm.xlu0 %363, %v318
      %v365 = vpop.permute.xlu0 %364
      %368 = vset.pattern.permute.xlu0 0
      %369 = vperm.xlu0 %368, %v319
      %v370 = vpop.permute.xlu0 %369
      %373 = vset.pattern.permute.xlu0 0
      %374 = vperm.xlu0 %373, %v320
      %v375 = vpop.permute.xlu0 %374
      %378 = vset.pattern.permute.xlu0 0
      %379 = vperm.xlu0 %378, %v321
      %v380 = vpop.permute.xlu0 %379
      %383 = vset.pattern.permute.xlu0 0
      %384 = vperm.xlu0 %383, %v322
      %v385 = vpop.permute.xlu0 %384
      %388 = vset.pattern.permute.xlu0 0
      %389 = vperm.xlu0 %388, %v323
      %v390 = vpop.permute.xlu0 %389
      %393 = vset.pattern.permute.xlu0 0
      %394 = vperm.xlu0 %393, %v324
      %v395 = vpop.permute.xlu0 %394
      %398 = vset.pattern.permute.xlu0 0
      %399 = vperm.xlu0 %398, %v325
      %v400 = vpop.permute.xlu0 %399
      %403 = vset.pattern.permute.xlu0 0
      %404 = vperm.xlu0 %403, %v326
      %v405 = vpop.permute.xlu0 %404
      %vm407 = vcmask 719872
      %v409 = vsel %vm407, %v280, 0
      %v412 = vsel %vm407, %v282, 0
      %v415 = vsel %vm407, %v284, 0
      %v418 = vsel %vm407, %v286, 0
      %v421 = vsel %vm407, %v288, 0
      %v424 = vsel %vm407, %v290, 0
      %v427 = vsel %vm407, %v292, 0
      %v430 = vsel %vm407, %v294, 0
      %v433 = vsel %vm407, %v296, 0
      %v436 = vsel %vm407, %v298, 0
      %v439 = vsel %vm407, %v300, 0
      %v442 = vsel %vm407, %v302, 0
      %v445 = vsel %vm407, %v304, 0
      %v448 = vsel %vm407, %v306, 0
      %v451 = vsel %vm407, %v308, 0
      %v454 = vsel %vm407, %v310, 0
      %456 = vmatpush.msra.mxu0 %v255
      %457 = vmatpush.msra.mxu0 %v253
      %458 = vmatpush.msra.mxu0 %v251
      %459 = vmatpush.msra.mxu0 %v249
      %460 = vmatpush.msra.mxu0 %v247
      %461 = vmatpush.msra.mxu0 %v245
      %462 = vmatpush.msra.mxu0 %v243
      %463 = vmatpush.msra.mxu0 %v241
      %464 = vmatpush.msra.mxu0 %v239
      %465 = vmatpush.msra.mxu0 %v237
      %466 = vmatpush.msra.mxu0 %v235
      %467 = vmatpush.msra.mxu0 %v233
      %468 = vmatpush.msra.mxu0 %v231
      %469 = vmatpush.msra.mxu0 %v229
      %470 = vmatpush.msra.mxu0 %v227
      %471 = vmatpush.msra.mxu0 %v225
      %472 = vmatmul.f32.gmra.mxu0 %v279
      %v473 = vpop.f32.mrf.mxu0
      %v474 = vadd.f32 %v330, %v473
      %475 = vmatmul.f32.gmra.mxu0 %v281
      %v476 = vpop.f32.mrf.mxu0
      %v477 = vadd.f32 %v335, %v476
      %478 = vmatmul.f32.gmra.mxu0 %v283
      %v479 = vpop.f32.mrf.mxu0
      %v480 = vadd.f32 %v340, %v479
      %481 = vmatmul.f32.gmra.mxu0 %v285
      %v482 = vpop.f32.mrf.mxu0
      %v483 = vadd.f32 %v345, %v482
      %484 = vmatmul.f32.gmra.mxu0 %v287
      %v485 = vpop.f32.mrf.mxu0
      %v486 = vadd.f32 %v350, %v485
      %487 = vmatmul.f32.gmra.mxu0 %v289
      %v488 = vpop.f32.mrf.mxu0
      %v489 = vadd.f32 %v355, %v488
      %490 = vmatmul.f32.gmra.mxu0 %v291
      %v491 = vpop.f32.mrf.mxu0
      %v492 = vadd.f32 %v360, %v491
      %493 = vmatmul.f32.gmra.mxu0 %v293
      %v494 = vpop.f32.mrf.mxu0
      %v495 = vadd.f32 %v365, %v494
      %496 = vmatmul.f32.gmra.mxu0 %v295
      %v497 = vpop.f32.mrf.mxu0
      %v498 = vadd.f32 %v370, %v497
      %499 = vmatmul.f32.gmra.mxu0 %v297
      %v500 = vpop.f32.mrf.mxu0
      %v501 = vadd.f32 %v375, %v500
      %502 = vmatmul.f32.gmra.mxu0 %v299
      %v503 = vpop.f32.mrf.mxu0
      %v504 = vadd.f32 %v380, %v503
      %505 = vmatmul.f32.gmra.mxu0 %v301
      %v506 = vpop.f32.mrf.mxu0
      %v507 = vadd.f32 %v385, %v506
      %508 = vmatmul.f32.gmra.mxu0 %v303
      %v509 = vpop.f32.mrf.mxu0
      %v510 = vadd.f32 %v390, %v509
      %511 = vmatmul.f32.gmra.mxu0 %v305
      %v512 = vpop.f32.mrf.mxu0
      %v513 = vadd.f32 %v395, %v512
      %514 = vmatmul.f32.gmra.mxu0 %v307
      %v515 = vpop.f32.mrf.mxu0
      %v516 = vadd.f32 %v400, %v515
      %517 = vmatmul.f32.gmra.mxu0 %v309
      %v518 = vpop.f32.mrf.mxu0
      %v519 = vadd.f32 %v405, %v518
      %520 = vdwg.mxu0
      %521 = vmatpush.msra.mxu0 0.0
      %522 = vmatpush.msra.mxu0 0.0
      %523 = vmatpush.msra.mxu0 0.0
      %524 = vmatpush.msra.mxu0 0.0
      %525 = vmatpush.msra.mxu0 0.0
      %526 = vmatpush.msra.mxu0 %v277
      %527 = vmatpush.msra.mxu0 %v275
      %528 = vmatpush.msra.mxu0 %v273
      %529 = vmatpush.msra.mxu0 %v271
      %530 = vmatpush.msra.mxu0 %v269
      %531 = vmatpush.msra.mxu0 %v267
      %532 = vmatpush.msra.mxu0 %v265
      %533 = vmatpush.msra.mxu0 %v263
      %534 = vmatpush.msra.mxu0 %v261
      %535 = vmatpush.msra.mxu0 %v259
      %536 = vmatpush.msra.mxu0 %v257
      %537 = vmatmul.f32.gmra.mxu0 %v409
      %v538 = vpop.f32.mrf.mxu0
      %v539 = vadd.f32 %v474, %v538
      %540 = vmatmul.f32.gmra.mxu0 %v412
      %v541 = vpop.f32.mrf.mxu0
      %v542 = vadd.f32 %v477, %v541
      %543 = vmatmul.f32.gmra.mxu0 %v415
      %v544 = vpop.f32.mrf.mxu0
      %v545 = vadd.f32 %v480, %v544
      %546 = vmatmul.f32.gmra.mxu0 %v418
      %v547 = vpop.f32.mrf.mxu0
      %v548 = vadd.f32 %v483, %v547
      %549 = vmatmul.f32.gmra.mxu0 %v421
      %v550 = vpop.f32.mrf.mxu0
      %v551 = vadd.f32 %v486, %v550
      %552 = vmatmul.f32.gmra.mxu0 %v424
      %v553 = vpop.f32.mrf.mxu0
      %v554 = vadd.f32 %v489, %v553
      %555 = vmatmul.f32.gmra.mxu0 %v427
      %v556 = vpop.f32.mrf.mxu0
      %v557 = vadd.f32 %v492, %v556
      %558 = vmatmul.f32.gmra.mxu0 %v430
      %v559 = vpop.f32.mrf.mxu0
      %v560 = vadd.f32 %v495, %v559
      %561 = vmatmul.f32.gmra.mxu0 %v433
      %v562 = vpop.f32.mrf.mxu0
      %v563 = vadd.f32 %v498, %v562
      %564 = vmatmul.f32.gmra.mxu0 %v436
      %v565 = vpop.f32.mrf.mxu0
      %v566 = vadd.f32 %v501, %v565
      %567 = vmatmul.f32.gmra.mxu0 %v439
      %v568 = vpop.f32.mrf.mxu0
      %v569 = vadd.f32 %v504, %v568
      %570 = vmatmul.f32.gmra.mxu0 %v442
      %v571 = vpop.f32.mrf.mxu0
      %v572 = vadd.f32 %v507, %v571
      %573 = vmatmul.f32.gmra.mxu0 %v445
      %v574 = vpop.f32.mrf.mxu0
      %v575 = vadd.f32 %v510, %v574
      %576 = vmatmul.f32.gmra.mxu0 %v448
      %v577 = vpop.f32.mrf.mxu0
      %v578 = vadd.f32 %v513, %v577
      %579 = vmatmul.f32.gmra.mxu0 %v451
      %v580 = vpop.f32.mrf.mxu0
      %v581 = vadd.f32 %v516, %v580
      %582 = vmatmul.f32.gmra.mxu0 %v454
      %v583 = vpop.f32.mrf.mxu0
      %v584 = vadd.f32 %v519, %v583
      %585 = vdwg.mxu0
      %586 = vmatpush.msra.mxu0 %v256
      %587 = vmatpush.msra.mxu0 %v254
      %588 = vmatpush.msra.mxu0 %v252
      %589 = vmatpush.msra.mxu0 %v250
      %590 = vmatpush.msra.mxu0 %v248
      %591 = vmatpush.msra.mxu0 %v246
      %592 = vmatpush.msra.mxu0 %v244
      %593 = vmatpush.msra.mxu0 %v242
      %594 = vmatpush.msra.mxu0 %v240
      %595 = vmatpush.msra.mxu0 %v238
      %596 = vmatpush.msra.mxu0 %v236
      %597 = vmatpush.msra.mxu0 %v234
      %598 = vmatpush.msra.mxu0 %v232
      %599 = vmatpush.msra.mxu0 %v230
      %600 = vmatpush.msra.mxu0 %v228
      %601 = vmatpush.msra.mxu0 %v226
      %602 = vmatmul.f32.gmra.mxu0 %v279
      %v603 = vpop.f32.mrf.mxu0
      %v604 = vadd.f32 %v330, %v603
      %605 = vmatmul.f32.gmra.mxu0 %v281
      %v606 = vpop.f32.mrf.mxu0
      %v607 = vadd.f32 %v335, %v606
      %608 = vmatmul.f32.gmra.mxu0 %v283
      %v609 = vpop.f32.mrf.mxu0
      %v610 = vadd.f32 %v340, %v609
      %611 = vmatmul.f32.gmra.mxu0 %v285
      %v612 = vpop.f32.mrf.mxu0
      %v613 = vadd.f32 %v345, %v612
      %614 = vmatmul.f32.gmra.mxu0 %v287
      %v615 = vpop.f32.mrf.mxu0
      %v616 = vadd.f32 %v350, %v615
      %617 = vmatmul.f32.gmra.mxu0 %v289
      %v618 = vpop.f32.mrf.mxu0
      %v619 = vadd.f32 %v355, %v618
      %620 = vmatmul.f32.gmra.mxu0 %v291
      %v621 = vpop.f32.mrf.mxu0
      %v622 = vadd.f32 %v360, %v621
      %623 = vmatmul.f32.gmra.mxu0 %v293
      %v624 = vpop.f32.mrf.mxu0
      %v625 = vadd.f32 %v365, %v624
      %626 = vmatmul.f32.gmra.mxu0 %v295
      %v627 = vpop.f32.mrf.mxu0
      %v628 = vadd.f32 %v370, %v627
      %629 = vmatmul.f32.gmra.mxu0 %v297
      %v630 = vpop.f32.mrf.mxu0
      %v631 = vadd.f32 %v375, %v630
      %632 = vmatmul.f32.gmra.mxu0 %v299
      %v633 = vpop.f32.mrf.mxu0
      %v634 = vadd.f32 %v380, %v633
      %635 = vmatmul.f32.gmra.mxu0 %v301
      %v636 = vpop.f32.mrf.mxu0
      %v637 = vadd.f32 %v385, %v636
      %638 = vmatmul.f32.gmra.mxu0 %v303
      %v639 = vpop.f32.mrf.mxu0
      %v640 = vadd.f32 %v390, %v639
      %641 = vmatmul.f32.gmra.mxu0 %v305
      %v642 = vpop.f32.mrf.mxu0
      %v643 = vadd.f32 %v395, %v642
      %644 = vmatmul.f32.gmra.mxu0 %v307
      %v645 = vpop.f32.mrf.mxu0
      %v646 = vadd.f32 %v400, %v645
      %647 = vmatmul.f32.gmra.mxu0 %v309
      %v648 = vpop.f32.mrf.mxu0
      %v649 = vadd.f32 %v405, %v648
      %650 = vdwg.mxu0
      %651 = vmatpush.msra.mxu0 0.0
      %652 = vmatpush.msra.mxu0 0.0
      %653 = vmatpush.msra.mxu0 0.0
      %654 = vmatpush.msra.mxu0 0.0
      %655 = vmatpush.msra.mxu0 0.0
      %656 = vmatpush.msra.mxu0 %v278
      %657 = vmatpush.msra.mxu0 %v276
      %658 = vmatpush.msra.mxu0 %v274
      %659 = vmatpush.msra.mxu0 %v272
      %660 = vmatpush.msra.mxu0 %v270
      %661 = vmatpush.msra.mxu0 %v268
      %662 = vmatpush.msra.mxu0 %v266
      %663 = vmatpush.msra.mxu0 %v264
      %664 = vmatpush.msra.mxu0 %v262
      %665 = vmatpush.msra.mxu0 %v260
      %666 = vmatpush.msra.mxu0 %v258
      %667 = vmatmul.f32.gmra.mxu0 %v409
      %v668 = vpop.f32.mrf.mxu0
      %v669 = vadd.f32 %v604, %v668
      %670 = vmatmul.f32.gmra.mxu0 %v412
      %v671 = vpop.f32.mrf.mxu0
      %v672 = vadd.f32 %v607, %v671
      %673 = vmatmul.f32.gmra.mxu0 %v415
      %v674 = vpop.f32.mrf.mxu0
      %v675 = vadd.f32 %v610, %v674
      %676 = vmatmul.f32.gmra.mxu0 %v418
      %v677 = vpop.f32.mrf.mxu0
      %v678 = vadd.f32 %v613, %v677
      %679 = vmatmul.f32.gmra.mxu0 %v421
      %v680 = vpop.f32.mrf.mxu0
      %v681 = vadd.f32 %v616, %v680
      %682 = vmatmul.f32.gmra.mxu0 %v424
      %v683 = vpop.f32.mrf.mxu0
      %v684 = vadd.f32 %v619, %v683
      %685 = vmatmul.f32.gmra.mxu0 %v427
      %v686 = vpop.f32.mrf.mxu0
      %v687 = vadd.f32 %v622, %v686
      %688 = vmatmul.f32.gmra.mxu0 %v430
      %v689 = vpop.f32.mrf.mxu0
      %v690 = vadd.f32 %v625, %v689
      %691 = vmatmul.f32.gmra.mxu0 %v433
      %v692 = vpop.f32.mrf.mxu0
      %v693 = vadd.f32 %v628, %v692
      %694 = vmatmul.f32.gmra.mxu0 %v436
      %v695 = vpop.f32.mrf.mxu0
      %v696 = vadd.f32 %v631, %v695
      %697 = vmatmul.f32.gmra.mxu0 %v439
      %v698 = vpop.f32.mrf.mxu0
      %v699 = vadd.f32 %v634, %v698
      %700 = vmatmul.f32.gmra.mxu0 %v442
      %v701 = vpop.f32.mrf.mxu0
      %v702 = vadd.f32 %v637, %v701
      %703 = vmatmul.f32.gmra.mxu0 %v445
      %v704 = vpop.f32.mrf.mxu0
      %v705 = vadd.f32 %v640, %v704
      %706 = vmatmul.f32.gmra.mxu0 %v448
      %v707 = vpop.f32.mrf.mxu0
      %v708 = vadd.f32 %v643, %v707
      %709 = vmatmul.f32.gmra.mxu0 %v451
      %v710 = vpop.f32.mrf.mxu0
      %v711 = vadd.f32 %v646, %v710
      %712 = vmatmul.f32.gmra.mxu0 %v454
      %v713 = vpop.f32.mrf.mxu0
      %v714 = vadd.f32 %v649, %v713
      %715 = vdwg.mxu0
      %v716 = vmax.f32 %v539, 0.0
      %v717 = vmax.f32 %v669, 0.0
      %v718 = vmax.f32 %v542, 0.0
      %v719 = vmax.f32 %v672, 0.0
      %v720 = vmax.f32 %v545, 0.0
      %v721 = vmax.f32 %v675, 0.0
      %v722 = vmax.f32 %v548, 0.0
      %v723 = vmax.f32 %v678, 0.0
      %v724 = vmax.f32 %v551, 0.0
      %v725 = vmax.f32 %v681, 0.0
      %v726 = vmax.f32 %v554, 0.0
      %v727 = vmax.f32 %v684, 0.0
      %v728 = vmax.f32 %v557, 0.0
      %v729 = vmax.f32 %v687, 0.0
      %v730 = vmax.f32 %v560, 0.0
      %v731 = vmax.f32 %v690, 0.0
      %v732 = vmax.f32 %v563, 0.0
      %v733 = vmax.f32 %v693, 0.0
      %v734 = vmax.f32 %v566, 0.0
      %v735 = vmax.f32 %v696, 0.0
      %v736 = vmax.f32 %v569, 0.0
      %v737 = vmax.f32 %v699, 0.0
      %v738 = vmax.f32 %v572, 0.0
      %v739 = vmax.f32 %v702, 0.0
      %v740 = vmax.f32 %v575, 0.0
      %v741 = vmax.f32 %v705, 0.0
      %v742 = vmax.f32 %v578, 0.0
      %v743 = vmax.f32 %v708, 0.0
      %v744 = vmax.f32 %v581, 0.0
      %v745 = vmax.f32 %v711, 0.0
      %v746 = vmax.f32 %v584, 0.0
      %v747 = vmax.f32 %v714, 0.0
      %v748 = vld [vmem:[%s3] sm:$0xff]
      %v749 = vld [vmem:[%s3 + $0x8] sm:$0xff]
      %v750 = vld [vmem:[%s3 + $0x10] sm:$0xff]
      %v751 = vld [vmem:[%s3 + $0x18] sm:$0xff]
      %v752 = vld [vmem:[%s3 + $0x20] sm:$0xff]
      %v753 = vld [vmem:[%s3 + $0x28] sm:$0xff]
      %v754 = vld [vmem:[%s3 + $0x30] sm:$0xff]
      %v755 = vld [vmem:[%s3 + $0x38] sm:$0xff]
      %v756 = vld [vmem:[%s3 + $0x40] sm:$0xff]
      %v757 = vld [vmem:[%s3 + $0x48] sm:$0xff]
      %v758 = vld [vmem:[%s3 + $0x50] sm:$0xff]
      %v759 = vld [vmem:[%s4] sm:$0xff]
      %v760 = vld [vmem:[%s4 + $0x8] sm:$0xff]
      %v761 = vld [vmem:[%s4 + $0x10] sm:$0xff]
      %v762 = vld [vmem:[%s4 + $0x18] sm:$0xff]
      %v763 = vld [vmem:[%s4 + $0x20] sm:$0xff]
      %v764 = vld [vmem:[%s4 + $0x28] sm:$0xff]
      %v765 = vld [vmem:[%s4 + $0x30] sm:$0xff]
      %v766 = vld [vmem:[%s4 + $0x38] sm:$0xff]
      %v767 = vld [vmem:[%s4 + $0x40] sm:$0xff]
      %v768 = vld [vmem:[%s4 + $0x48] sm:$0xff]
      %v769 = vld [vmem:[%s4 + $0x50] sm:$0xff]
      %771 = vset.pattern.permute.xlu0 0
      %772 = vperm.xlu0 %771, %v759
      %v773 = vpop.permute.xlu0 %772
      %776 = vset.pattern.permute.xlu0 0
      %777 = vperm.xlu0 %776, %v760
      %v778 = vpop.permute.xlu0 %777
      %781 = vset.pattern.permute.xlu0 0
      %782 = vperm.xlu0 %781, %v761
      %v783 = vpop.permute.xlu0 %782
      %786 = vset.pattern.permute.xlu0 0
      %787 = vperm.xlu0 %786, %v762
      %v788 = vpop.permute.xlu0 %787
      %791 = vset.pattern.permute.xlu0 0
      %792 = vperm.xlu0 %791, %v763
      %v793 = vpop.permute.xlu0 %792
      %796 = vset.pattern.permute.xlu0 0
      %797 = vperm.xlu0 %796, %v764
      %v798 = vpop.permute.xlu0 %797
      %801 = vset.pattern.permute.xlu0 0
      %802 = vperm.xlu0 %801, %v765
      %v803 = vpop.permute.xlu0 %802
      %806 = vset.pattern.permute.xlu0 0
      %807 = vperm.xlu0 %806, %v766
      %v808 = vpop.permute.xlu0 %807
      %811 = vset.pattern.permute.xlu0 0
      %812 = vperm.xlu0 %811, %v767
      %v813 = vpop.permute.xlu0 %812
      %816 = vset.pattern.permute.xlu0 0
      %817 = vperm.xlu0 %816, %v768
      %v818 = vpop.permute.xlu0 %817
      %821 = vset.pattern.permute.xlu0 0
      %822 = vperm.xlu0 %821, %v769
      %v823 = vpop.permute.xlu0 %822
      %825 = vmatpush.msra.mxu0 %v746
      %826 = vmatpush.msra.mxu0 %v744
      %827 = vmatpush.msra.mxu0 %v742
      %828 = vmatpush.msra.mxu0 %v740
      %829 = vmatpush.msra.mxu0 %v738
      %830 = vmatpush.msra.mxu0 %v736
      %831 = vmatpush.msra.mxu0 %v734
      %832 = vmatpush.msra.mxu0 %v732
      %833 = vmatpush.msra.mxu0 %v730
      %834 = vmatpush.msra.mxu0 %v728
      %835 = vmatpush.msra.mxu0 %v726
      %836 = vmatpush.msra.mxu0 %v724
      %837 = vmatpush.msra.mxu0 %v722
      %838 = vmatpush.msra.mxu0 %v720
      %839 = vmatpush.msra.mxu0 %v718
      %840 = vmatpush.msra.mxu0 %v716
      %841 = vmatmul.f32.gmra.mxu0 %v748
      %v842 = vpop.f32.mrf.mxu0
      %v843 = vadd.f32 %v773, %v842
      %844 = vmatmul.f32.gmra.mxu0 %v749
      %v845 = vpop.f32.mrf.mxu0
      %v846 = vadd.f32 %v778, %v845
      %847 = vmatmul.f32.gmra.mxu0 %v750
      %v848 = vpop.f32.mrf.mxu0
      %v849 = vadd.f32 %v783, %v848
      %850 = vmatmul.f32.gmra.mxu0 %v751
      %v851 = vpop.f32.mrf.mxu0
      %v852 = vadd.f32 %v788, %v851
      %853 = vmatmul.f32.gmra.mxu0 %v752
      %v854 = vpop.f32.mrf.mxu0
      %v855 = vadd.f32 %v793, %v854
      %856 = vmatmul.f32.gmra.mxu0 %v753
      %v857 = vpop.f32.mrf.mxu0
      %v858 = vadd.f32 %v798, %v857
      %859 = vmatmul.f32.gmra.mxu0 %v754
      %v860 = vpop.f32.mrf.mxu0
      %v861 = vadd.f32 %v803, %v860
      %862 = vmatmul.f32.gmra.mxu0 %v755
      %v863 = vpop.f32.mrf.mxu0
      %v864 = vadd.f32 %v808, %v863
      %865 = vmatmul.f32.gmra.mxu0 %v756
      %v866 = vpop.f32.mrf.mxu0
      %v867 = vadd.f32 %v813, %v866
      %868 = vmatmul.f32.gmra.mxu0 %v757
      %v869 = vpop.f32.mrf.mxu0
      %v870 = vadd.f32 %v818, %v869
      %871 = vmatmul.f32.gmra.mxu0 %v758
      %v872 = vpop.f32.mrf.mxu0
      %v873 = vadd.f32 %v823, %v872
      %874 = vdwg.mxu0
      %875 = vmatpush.msra.mxu0 %v747
      %876 = vmatpush.msra.mxu0 %v745
      %877 = vmatpush.msra.mxu0 %v743
      %878 = vmatpush.msra.mxu0 %v741
      %879 = vmatpush.msra.mxu0 %v739
      %880 = vmatpush.msra.mxu0 %v737
      %881 = vmatpush.msra.mxu0 %v735
      %882 = vmatpush.msra.mxu0 %v733
      %883 = vmatpush.msra.mxu0 %v731
      %884 = vmatpush.msra.mxu0 %v729
      %885 = vmatpush.msra.mxu0 %v727
      %886 = vmatpush.msra.mxu0 %v725
      %887 = vmatpush.msra.mxu0 %v723
      %888 = vmatpush.msra.mxu0 %v721
      %889 = vmatpush.msra.mxu0 %v719
      %890 = vmatpush.msra.mxu0 %v717
      %891 = vmatmul.f32.gmra.mxu0 %v748
      %v892 = vpop.f32.mrf.mxu0
      %v893 = vadd.f32 %v773, %v892
      %894 = vmatmul.f32.gmra.mxu0 %v749
      %v895 = vpop.f32.mrf.mxu0
      %v896 = vadd.f32 %v778, %v895
      %897 = vmatmul.f32.gmra.mxu0 %v750
      %v898 = vpop.f32.mrf.mxu0
      %v899 = vadd.f32 %v783, %v898
      %900 = vmatmul.f32.gmra.mxu0 %v751
      %v901 = vpop.f32.mrf.mxu0
      %v902 = vadd.f32 %v788, %v901
      %903 = vmatmul.f32.gmra.mxu0 %v752
      %v904 = vpop.f32.mrf.mxu0
      %v905 = vadd.f32 %v793, %v904
      %906 = vmatmul.f32.gmra.mxu0 %v753
      %v907 = vpop.f32.mrf.mxu0
      %v908 = vadd.f32 %v798, %v907
      %909 = vmatmul.f32.gmra.mxu0 %v754
      %v910 = vpop.f32.mrf.mxu0
      %v911 = vadd.f32 %v803, %v910
      %912 = vmatmul.f32.gmra.mxu0 %v755
      %v913 = vpop.f32.mrf.mxu0
      %v914 = vadd.f32 %v808, %v913
      %915 = vmatmul.f32.gmra.mxu0 %v756
      %v916 = vpop.f32.mrf.mxu0
      %v917 = vadd.f32 %v813, %v916
      %918 = vmatmul.f32.gmra.mxu0 %v757
      %v919 = vpop.f32.mrf.mxu0
      %v920 = vadd.f32 %v818, %v919
      %921 = vmatmul.f32.gmra.mxu0 %v758
      %v922 = vpop.f32.mrf.mxu0
      %v923 = vadd.f32 %v823, %v922
      %924 = vdwg.mxu0
      %925 = vst [vmem:[%s224] sm:$0xff] %v843
      %926 = vst [vmem:[%s224 + $0x8] sm:$0xff] %v893
      %927 = vst [vmem:[%s224 + $0x10] sm:$0xff] %v846
      %928 = vst [vmem:[%s224 + $0x18] sm:$0xff] %v896
      %929 = vst [vmem:[%s224 + $0x20] sm:$0xff] %v849
      %930 = vst [vmem:[%s224 + $0x28] sm:$0xff] %v899
      %931 = vst [vmem:[%s224 + $0x30] sm:$0xff] %v852
      %932 = vst [vmem:[%s224 + $0x38] sm:$0xff] %v902
      %933 = vst [vmem:[%s224 + $0x40] sm:$0xff] %v855
      %934 = vst [vmem:[%s224 + $0x48] sm:$0xff] %v905
      %935 = vst [vmem:[%s224 + $0x50] sm:$0xff] %v858
      %936 = vst [vmem:[%s224 + $0x58] sm:$0xff] %v908
      %937 = vst [vmem:[%s224 + $0x60] sm:$0xff] %v861
      %938 = vst [vmem:[%s224 + $0x68] sm:$0xff] %v911
      %939 = vst [vmem:[%s224 + $0x70] sm:$0xff] %v864
      %940 = vst [vmem:[%s224 + $0x78] sm:$0xff] %v914
      %941 = vst [vmem:[%s224 + $0x80] sm:$0xff] %v867
      %942 = vst [vmem:[%s224 + $0x88] sm:$0xff] %v917
      %943 = vst [vmem:[%s224 + $0x90] sm:$0xff] %v870
      %944 = vst [vmem:[%s224 + $0x98] sm:$0xff] %v920
      %945 = vst [vmem:[%s224 + $0xa0] sm:$0xff] %v873
      %946 = vst [vmem:[%s224 + $0xa8] sm:$0xff] %v923
      %p947 = scmp.lt.s32.totalorder %s16, 1
      %s948 = scalar_select %p947, %s16, 1
      %s949 = smul.addr %s948, 22
      %s950 = smul.addr %s949, 8
      %s951 = scalar_lea.vmem %s5, %s950
      // Predicated region
      $region41: #{_movenet_forward.1} parent=39 // pred_check
        %p952 = pneg %p144
      $region42: #{_movenet_forward.1} parent=39 // pred_check_branch
        %954 = sbr.rel (%p952) target = $region44
      $region43: #{_movenet_forward.1} parent=39 // pred_region
        _
      $region44: #{_movenet_forward.1} parent=39 // pred_fallthru
        _
    $region40: #{_movenet_forward.1} parent=5 // pred_fallthru
      _
    %p955 = scmp.le.s32.totalorder 2, %s11
    // Predicated region
    $region45: #{_movenet_forward.1} parent=5 // pred_check
      %p956 = pneg %p955
    $region46: #{_movenet_forward.1} parent=5 // pred_check_branch
      %958 = sbr.rel (%p956) target = $region48
    $region47: #{_movenet_forward.1} parent=5 // pred_region
      %s959 = ssub.s32 %s11, 2
      // Predicated region
      $region49: #{_movenet_forward.1} parent=47 // pred_check
        %p960 = pneg %p150
      $region50: #{_movenet_forward.1} parent=47 // pred_check_branch
        %962 = sbr.rel (%p960) target = $region52
      $region51: #{_movenet_forward.1} parent=47 // pred_region
        %p963 = scmp.lt.s32.totalorder %s17, 1
        %s964 = scalar_select %p963, %s17, 1
        %s965 = smul.addr %s964, 22
        %s966 = smul.addr %s965, 8
        %s967 = scalar_lea.vmem %s5, %s966
      $region52: #{_movenet_forward.1} parent=47 // pred_fallthru
        _
    $region48: #{_movenet_forward.1} parent=5 // pred_fallthru
      _
  $region6: #{_movenet_forward.1} parent=0 // loop_footer
    %s15 = sadd.s32 1, %s11
  $region7: #{_movenet_forward.1} parent=0 // loop_footer_branch
    %10 = sbr.rel target = $region3
  $region8: #{_movenet_forward.1} parent=0 // loop_exit
    _

</llo_original>
